<compile_context>
chip_gen: v5e
topology: v5e:2x2
jax: 0.10.0
libtpu: 0.0.40
codegen_flags: <defaults>
</compile_context>

<pallas_src>
import functools

import jax
import jax.numpy as jnp
from jax import lax
from jax.experimental import pallas as pl
from jax.experimental.pallas import tpu as pltpu


def _vmem_capacity_bytes():
    """Physical per-TensorCore VMEM; conservative (v7x) default if query fails."""
    try:
        info = pltpu.get_tpu_info()
        for attr in ("vmem_capacity_bytes", "vmem_bytes", "vmem_size_bytes"):
            v = getattr(info, attr, None)
            if v:
                return int(v)
    except Exception:
        pass
    return 64 * 1024 * 1024


def _pick_tq(S, D, in_bytes, out_bytes, attn_bytes, budget_bytes, kv_buffers):
    """Largest legal q-tile keeping the per-step VMEM working set under budget.

    Per-step VMEM (bytes):
      kv block   : kv_buffers * S * D * in_bytes      (resident across q-tiles)
      q block    : 2 * tq * D * in_bytes              (double-buffered)
      out block  : 2 * tq * D * out_bytes
      attn block : 2 * tq * S * attn_bytes            (dominant writeback)
      f32 temps  : ~3 * tq * S * 4                    (dots / e / attn)
    Returns None when even tq=8 does not fit.
    """
    fixed = kv_buffers * S * D * in_bytes
    per_tq = 2 * D * in_bytes + 2 * D * out_bytes + 2 * S * attn_bytes + 3 * S * 4
    avail = budget_bytes - fixed
    if avail < 8 * per_tq:
        return None
    cap = avail // per_tq
    if cap >= S:
        return S  # whole sequence in a single q-tile
    # Prefer MXU-aligned tiles: 256 (v6e/v7x 256x256 MXU), 128 (v5e 128x128),
    # then 16 (bf16 sublane packing), then 8 (f32 sublane minimum).
    for step in (256, 128, 16, 8):
        t = (cap // step) * step
        while t >= step:
            if S % t == 0:
                return t
            t -= step
    return None


def _attention_kernel(xq_ref, kv_ref, out_ref, attn_ref, *,
                      scale, mm_dtype, fold_scale):
    # xq_ref block: (1, TQ, D) -- this q-tile's rows (also the residual).
    # kv_ref block: (1, S,  D) -- full keys/values, resident across q-tiles.
    xq = xq_ref[0]                                   # (TQ, D) native dtype
    kv = kv_ref[0]                                   # (S,  D) native dtype

    q = xq.astype(mm_dtype)
    k = kv.astype(mm_dtype)

    if fold_scale:
        # f32 operands: fold 1/sqrt(D) into the (small) q operand (TQ*D muls).
        q = q * jnp.asarray(scale, dtype=mm_dtype)

    # dots = q @ k^T -- contract last dims directly (no explicit transpose);
    # MXU consumes mm_dtype operands, accumulates in f32.
    dots = lax.dot_general(
        q, k,
        dimension_numbers=(((1,), (1,)), ((), ())),
        preferred_element_type=jnp.float32,
    )                                                # (TQ, S) f32
    if not fold_scale:
        # Low-precision operands: scale the f32 dots (matches reference math).
        dots = dots * jnp.float32(scale)

    # Numerically stable softmax along the key axis (f32 math).
    m = jnp.max(dots, axis=-1, keepdims=True)
    e = jnp.exp(dots - m)
    denom = jnp.sum(e, axis=-1, keepdims=True)
    inv = pl.reciprocal(denom, approx=True)          # EUP vrcp (free slot)
    inv = inv * (2.0 - denom * inv)                  # one Newton step -> f32 accuracy
    attn = e * inv                                   # (TQ, S) f32

    # Store attn first, then reuse the stored block as the attn@v operand:
    # drops one live (TQ, S) temporary and lets the attn writeback start early.
    attn_ref[0] = attn.astype(attn_ref.dtype)
    p = attn_ref[0].astype(mm_dtype)
    out = jnp.dot(p, k, preferred_element_type=jnp.float32)   # (TQ, D) f32
    out_ref[0] = (out + xq.astype(jnp.float32)).astype(out_ref.dtype)


def attention_forward(x, *, matmul_dtype=None, attn_dtype=None):
    """x: (B, S, D) -> (out (B, S, D), attn (B, S, S)).

    matmul_dtype: optional lower-precision MXU operand dtype (e.g. bf16 when x
      is f32); accumulation stays f32.  Default: x.dtype (reference numerics).
    attn_dtype: optional attn output dtype (bf16 halves the dominant B*S^2
      writeback).  Default: x.dtype (reference numerics).
    """
    B, S, D = x.shape
    scale = float(D) ** (-0.5)

    in_dt = jnp.dtype(x.dtype)
    mm_dtype = jnp.dtype(matmul_dtype) if matmul_dtype is not None else in_dt
    attn_dt = jnp.dtype(attn_dtype) if attn_dtype is not None else in_dt
    out_dt = in_dt

    physical = _vmem_capacity_bytes()
    # ~48 MiB request on v7x (64 MiB physical), ~96 MiB on v5e/v6e (128 MiB).
    vmem_limit = min((physical * 3) // 4, 100 * 1024 * 1024)
    budget = (vmem_limit * 9) // 10      # headroom for compiler-internal scratch

    kv_buffers = 2
    tq = _pick_tq(S, D, in_dt.itemsize, out_dt.itemsize, attn_dt.itemsize,
                  budget, kv_buffers=2)
    if tq is None:
        # Constant-per-batch K/V block: drop to a single buffer only when the
        # default double-buffered scheme no longer fits (v7x / very long S).
        tq = _pick_tq(S, D, in_dt.itemsize, out_dt.itemsize, attn_dt.itemsize,
                      budget, kv_buffers=1)
        kv_buffers = 1
    if tq is None:
        # TODO(synk): two-pass (flash-style) key-axis tiling for sequences too
        # long for the single-pass resident-KV scheme; not implemented here.
        raise ValueError(
            f"Attention kernel: S={S}, D={D} does not fit the single-pass "
            f"resident-KV VMEM budget ({budget} bytes)."
        )

    fold_scale = (mm_dtype == jnp.dtype(jnp.float32))
    kernel = functools.partial(_attention_kernel, scale=scale,
                               mm_dtype=mm_dtype, fold_scale=fold_scale)

    if kv_buffers == 1:
        kv_spec = pl.BlockSpec((1, S, D), lambda b, qi: (b, 0, 0),
                               pipeline_mode=pl.Buffered(1))
    else:
        kv_spec = pl.BlockSpec((1, S, D), lambda b, qi: (b, 0, 0))

    grid_spec = pltpu.PrefetchScalarGridSpec(
        num_scalar_prefetch=0,
        # b outermost so the resident (1, S, D) K/V block is reused across all
        # q-tiles of a batch before moving on.
        grid=(B, S // tq),
        in_specs=[
            pl.BlockSpec((1, tq, D), lambda b, qi: (b, qi, 0)),   # q / residual
            kv_spec,                                              # full K/V
        ],
        out_specs=[
            pl.BlockSpec((1, tq, D), lambda b, qi: (b, qi, 0)),   # out
            pl.BlockSpec((1, tq, S), lambda b, qi: (b, qi, 0)),   # attn (lane-dense)
        ],
    )

    out_shape = (
        jax.ShapeDtypeStruct((B, S, D), out_dt),
        jax.ShapeDtypeStruct((B, S, S), attn_dt),
    )

    cost = pl.CostEstimate(
        flops=4 * B * S * S * D,                      # q@k^T and attn@v
        transcendentals=B * S * S,                    # exp
        bytes_accessed=(2 * B * S * D * in_dt.itemsize
                        + B * S * D * out_dt.itemsize
                        + B * S * S * attn_dt.itemsize),
    )

    return pl.pallas_call(
        kernel,
        out_shape=out_shape,
        grid_spec=grid_spec,
        cost_estimate=cost,
        compiler_params=pltpu.CompilerParams(
            dimension_semantics=("parallel", "parallel"),
            vmem_limit_bytes=int(vmem_limit),
        ),
    )(x, x)


def _reference(x):
    """Pure-JAX reference mirroring the PyTorch forward."""
    D = x.shape[-1]
    scale = D ** (-0.5)
    dots = jnp.einsum("bsd,btd->bst", x, x) * scale
    attn = jax.nn.softmax(dots, axis=-1)
    out = jnp.einsum("bst,btd->bsd", attn, x) + x
    return out, attn


if __name__ == "__main__":
    # Small shapes consistent with the module: batch=2, seq=8, dim=32.
    key = jax.random.PRNGKey(0)
    B, S, D = 2, 8, 32
    x = jax.random.normal(key, (B, S, D), dtype=jnp.float32)

    ref_out, ref_attn = _reference(x)

    # Default path: native-dtype (f32) MXU operands -> matches the module.
    out, attn = attention_forward(x)
    out = jax.block_until_ready(out)
    attn = jax.block_until_ready(attn)
    assert out.shape == (B, S, D) and attn.shape == (B, S, S)
    assert jnp.allclose(out, ref_out, atol=1e-5, rtol=1e-5)
    assert jnp.allclose(attn, ref_attn, atol=1e-5, rtol=1e-5)

    # Reviewed fast path: bf16 MXU operands + bf16 attn writeback, f32 accum.
    out_bf, attn_bf = attention_forward(
        x, matmul_dtype=jnp.bfloat16, attn_dtype=jnp.bfloat16)
    out_bf = jax.block_until_ready(out_bf)
    attn_bf = jax.block_until_ready(attn_bf)
    assert out_bf.shape == (B, S, D) and attn_bf.shape == (B, S, S)
    assert bool(jnp.all(jnp.isfinite(out_bf)))
    assert bool(jnp.all(jnp.isfinite(attn_bf.astype(jnp.float32))))
    assert jnp.allclose(out_bf, ref_out, atol=2e-1, rtol=2e-1)

    print("KERNEL_OK")
</pallas_src>

<mosaic_0001>
module attributes {stable_mosaic.version = 11 : i64} {
  func.func @_attention_kernel(%arg0: i32, %arg1: i32, %arg2: memref<1x8x32xf32, #tpu.memory_space<vmem>>, %arg3: memref<1x8x32xf32, #tpu.memory_space<vmem>>, %arg4: memref<1x8x32xf32, #tpu.memory_space<vmem>>, %arg5: memref<1x8x8xf32, #tpu.memory_space<vmem>>) attributes {dimension_semantics = [#tpu.dimension_semantics<parallel>, #tpu.dimension_semantics<parallel>], iteration_bounds = array<i64: 2, 1>, scalar_prefetch = 0 : i64, scratch_operands = 0 : i64, tpu.core_type = #tpu.core_type<tc>, window_params = [{transform_indices = @transform_0, window_bounds = array<i64: 1, 8, 32>}, {transform_indices = @transform_1, window_bounds = array<i64: 1, 8, 32>}, {transform_indices = @transform_2, window_bounds = array<i64: 1, 8, 32>}, {transform_indices = @transform_3, window_bounds = array<i64: 1, 8, 8>}]} {
    %c0 = arith.constant 0 : index
    %c0_0 = arith.constant 0 : index
    %c0_1 = arith.constant 0 : index
    %0 = vector.load %arg2[%c0, %c0_0, %c0_1] : memref<1x8x32xf32, #tpu.memory_space<vmem>>, vector<1x8x32xf32>
    %1 = vector.shape_cast %0 : vector<1x8x32xf32> to vector<8x32xf32>
    %c0_2 = arith.constant 0 : index
    %c0_3 = arith.constant 0 : index
    %c0_4 = arith.constant 0 : index
    %2 = vector.load %arg3[%c0_2, %c0_3, %c0_4] : memref<1x8x32xf32, #tpu.memory_space<vmem>>, vector<1x8x32xf32>
    %3 = vector.shape_cast %2 : vector<1x8x32xf32> to vector<8x32xf32>
    %cst = arith.constant 0.176776692 : f32
    %4 = vector.broadcast %cst : f32 to vector<8x32xf32>
    %5 = arith.mulf %1, %4 : vector<8x32xf32>
    %cst_5 = arith.constant dense<0.000000e+00> : vector<8x8xf32>
    %6 = tpu.matmul %5, %3, %cst_5 {dimension_numbers = #tpu.dot_dimension_numbers<[1], [1], [0], [0], [0, 0, 1, 0], [], []>} : vector<8x32xf32>, vector<8x32xf32>, vector<8x8xf32> -> vector<8x8xf32>
    %cst_6 = arith.constant dense<0xFF800000> : vector<8xf32>
    %7 = vector.multi_reduction <maximumf>, %6, %cst_6 [1] : vector<8x8xf32> to vector<8xf32>
    %8 = vector.shape_cast %7 : vector<8xf32> to vector<8x1xf32>
    %9 = vector.broadcast %8 : vector<8x1xf32> to vector<8x8xf32>
    %10 = arith.subf %6, %9 : vector<8x8xf32>
    %11 = math.exp %10 : vector<8x8xf32>
    %cst_7 = arith.constant dense<0.000000e+00> : vector<8xf32>
    %12 = vector.multi_reduction <add>, %11, %cst_7 [1] : vector<8x8xf32> to vector<8xf32>
    %13 = vector.shape_cast %12 : vector<8xf32> to vector<8x1xf32>
    %14 = tpu.reciprocal %13 {approx = true} : vector<8x1xf32> -> vector<8x1xf32>
    %15 = arith.mulf %13, %14 : vector<8x1xf32>
    %cst_8 = arith.constant 2.000000e+00 : f32
    %16 = vector.broadcast %cst_8 : f32 to vector<8x1xf32>
    %17 = arith.subf %16, %15 : vector<8x1xf32>
    %18 = arith.mulf %14, %17 : vector<8x1xf32>
    %19 = vector.broadcast %18 : vector<8x1xf32> to vector<8x8xf32>
    %20 = arith.mulf %11, %19 : vector<8x8xf32>
    %c0_9 = arith.constant 0 : index
    %c0_10 = arith.constant 0 : index
    %c0_11 = arith.constant 0 : index
    %21 = vector.load %arg5[%c0_9, %c0_10, %c0_11] : memref<1x8x8xf32, #tpu.memory_space<vmem>>, vector<1x8x8xf32>
    %22 = vector.shape_cast %21 : vector<1x8x8xf32> to vector<8x8xf32>
    %23 = vector.shape_cast %20 : vector<8x8xf32> to vector<1x8x8xf32>
    tpu.vector_store %arg5[%c0_9, %c0_10, %c0_11], %23 {strides = array<i32>} : memref<1x8x8xf32, #tpu.memory_space<vmem>>, vector<1x8x8xf32>,
    %c0_12 = arith.constant 0 : index
    %c0_13 = arith.constant 0 : index
    %c0_14 = arith.constant 0 : index
    %24 = vector.load %arg5[%c0_12, %c0_13, %c0_14] : memref<1x8x8xf32, #tpu.memory_space<vmem>>, vector<1x8x8xf32>
    %25 = vector.shape_cast %24 : vector<1x8x8xf32> to vector<8x8xf32>
    %cst_15 = arith.constant dense<0.000000e+00> : vector<8x32xf32>
    %26 = tpu.matmul %25, %3, %cst_15 {dimension_numbers = #tpu.dot_dimension_numbers<[1], [0], [0], [1], [0, 0, 1, 1], [], []>} : vector<8x8xf32>, vector<8x32xf32>, vector<8x32xf32> -> vector<8x32xf32>
    %27 = arith.addf %26, %1 : vector<8x32xf32>
    %c0_16 = arith.constant 0 : index
    %c0_17 = arith.constant 0 : index
    %c0_18 = arith.constant 0 : index
    %28 = vector.load %arg4[%c0_16, %c0_17, %c0_18] : memref<1x8x32xf32, #tpu.memory_space<vmem>>, vector<1x8x32xf32>
    %29 = vector.shape_cast %28 : vector<1x8x32xf32> to vector<8x32xf32>
    %30 = vector.shape_cast %27 : vector<8x32xf32> to vector<1x8x32xf32>
    tpu.vector_store %arg4[%c0_16, %c0_17, %c0_18], %30 {strides = array<i32>} : memref<1x8x32xf32, #tpu.memory_space<vmem>>, vector<1x8x32xf32>,
    return
  }
  func.func @transform_0(%arg0: i32, %arg1: i32) -> (i32, i32, i32) {
    %c0_i32 = arith.constant 0 : i32
    %c0_i32_0 = arith.constant 0 : i32
    return %arg0, %arg1, %c0_i32 : i32, i32, i32
  }
  func.func @transform_1(%arg0: i32, %arg1: i32) -> (i32, i32, i32) {
    %c0_i32 = arith.constant 0 : i32
    %c0_i32_0 = arith.constant 0 : i32
    %c0_i32_1 = arith.constant 0 : i32
    return %arg0, %c0_i32, %c0_i32_0 : i32, i32, i32
  }
  func.func @transform_2(%arg0: i32, %arg1: i32) -> (i32, i32, i32) {
    %c0_i32 = arith.constant 0 : i32
    %c0_i32_0 = arith.constant 0 : i32
    return %arg0, %arg1, %c0_i32 : i32, i32, i32
  }
  func.func @transform_3(%arg0: i32, %arg1: i32) -> (i32, i32, i32) {
    %c0_i32 = arith.constant 0 : i32
    %c0_i32_0 = arith.constant 0 : i32
    return %arg0, %arg1, %c0_i32 : i32, i32, i32
  }
}

</mosaic_0001>

<llo_original>
// kernel: tpu_custom_call.1
$region0: #{tpu_custom_call.1}
  #allocation0 [shape = 'u32[]', space=smem, size = 0x4, offset = 0x4, fixed_abs, tag = 'smem constant byte address 0x4 - core index']
  #allocation1 [shape = 'u32[72,128]{1,0:T(1,128)}', space=vmem, size = 0x9000, scoped, tag = 'internal scratch']
  %s0 = inlined_call_operand.hbm [shape: f32[2,8,32], index: 0, kind: input, shape index: {}]
  %s1 = inlined_call_operand.hbm [shape: f32[2,8,32], index: 1, kind: input, shape index: {}]
  %s2 = inlined_call_operand.hbm [shape: f32[2,8,32], index: 2, kind: output, shape index: {0}]
  %s3 = inlined_call_operand.hbm [shape: f32[2,8,8], index: 3, kind: output, shape index: {1}]
  %4 = xla_tuple %s2, %s3
  %s5 = sld [smem:[#allocation0]]
  $region57: #{tpu_custom_call.1} parent=0
    _
  %s7 = ssub.s32 1, %s5
  %s8 = scalar_select 0, %s7, %s5
  $region1: #{tpu_custom_call.1} parent=0
    #allocation2 [shape = 'u8[8192]{0}', space=vmem, size = 0x2000, scoped, tag = 'input window, operand 0']
    #allocation3 [shape = 's32[2]{0}', space=sflag, size = 0x8, scoped, tag = 'scoped memory for tpu_custom_call.1']
    #allocation4 [shape = 's32[2]{0}', space=sflag, size = 0x8, scoped, tag = 'scoped memory for tpu_custom_call.1']
    #allocation5 [shape = 'u8[8192]{0}', space=vmem, size = 0x2000, scoped, tag = 'input window, operand 1']
    #allocation6 [shape = 's32[2]{0}', space=sflag, size = 0x8, scoped, tag = 'scoped memory for tpu_custom_call.1']
    #allocation7 [shape = 'u8[8192]{0}', space=vmem, size = 0x2000, scoped, tag = 'output window, operand 0']
    #allocation8 [shape = 'u8[8192]{0}', space=vmem, size = 0x2000, scoped, tag = 'output window, operand 1']
    #allocation9 [shape = 's32[2]{0}', space=sflag, size = 0x8, scoped, tag = 'scoped memory for tpu_custom_call.1']
    %9 = vsyncpa [#allocation3], 0
    %s10 = scalar_lea.sflag [#allocation3], 1
    %11 = vsyncpa %s10, 0
    %12 = vsyncpa [#allocation6], 0
    %s13 = scalar_lea.sflag [#allocation6], 1
    %14 = vsyncpa %s13, 0
    %15 = vsyncpa [#allocation4], 0
    %s16 = scalar_lea.sflag [#allocation4], 1
    %17 = vsyncpa %s16, 0
    %18 = vsyncpa [#allocation9], 0
    %s19 = scalar_lea.sflag [#allocation9], 1
    %20 = vsyncpa %s19, 0
    loop: start=0, step=1, limit=4
    $region2: #{tpu_custom_call.1} parent=1 // loop_pre_header
      _
    $region3: #{tpu_custom_call.1} parent=1 // loop_header
      %s22 = sphi 0, %s26
      %p23 = scmp.ge.s32.totalorder %s22, 4
      %s29 = sphi 0, %s41
      %s30 = sphi 0, %s37
      %s31 = sphi 0, %s29
      %s32 = sphi 0, %s30
      %s33 = sphi 0, %s31
      %s34 = sphi 0, %s32
      %s46 = sphi 0, %s48
      %s49 = sphi 0, %s46
      %s50 = sphi 0, %s49
      %s66 = sphi 0, %s50
      %s72 = sphi 0, %s74
      %s75 = sphi 0, %s72
      %s76 = sphi 0, %s75
      %s92 = sphi 0, %s76
      %s100 = sphi 0, %s102
      %s103 = sphi 0, %s100
      %s104 = sphi 0, %s103
      %s120 = sphi 0, %s104
      %s128 = sphi 0, %s130
      %s131 = sphi 0, %s128
      %s132 = sphi 0, %s131
      %s148 = sphi 0, %s132
    $region4: #{tpu_custom_call.1} parent=1 // loop_header_branch
      %25 = sbr.rel (%p23) target = $region8
    $region5: #{tpu_custom_call.1} parent=1 // loop_body
      %s27 = ssub.s32 %s22, 1
      %s28 = ssub.s32 %s22, 2
      %s35 = sadd.s32 1, %s30
      %p36 = scmp.ge.s32.totalorder %s35, 1
      %s37 = scalar_select %p36, 0, %s35
      %s38 = sadd.s32 1, %s29
      %s39 = scalar_select %p36, %s38, %s29
      %p40 = scmp.ge.s32.totalorder %s39, 2
      %s41 = scalar_select %p40, 0, %s39
      %s42 = ssub.s32 %s29, %s41
      %s43 = ssub.s32 %s30, %s37
      %s44 = sor.u32 %s42, %s43
      %p45 = scmp.eq.s32.totalorder %s44, 0
      %s47 = sadd.s32 %s46, 1
      %s48 = scalar_select %p45, %s46, %s47
      %p51 = pneg %p45
      %p52 = scmp.eq.s32.totalorder %s22, 1
      %p53 = por %p51, %p52
      %p54 = scmp.ne.s32.totalorder %s46, %s49
      %p55 = scmp.eq.s32.totalorder %s22, 0
      %p56 = por %p54, %p55
      %p57 = scmp.ne.s32.totalorder %s46, %s49
      %p58 = scmp.eq.s32.totalorder %s27, 1
      %p59 = por %p57, %p58
      %p60 = scmp.ne.s32.totalorder %s49, %s50
      %p61 = scmp.eq.s32.totalorder %s27, 0
      %p62 = por %p60, %p61
      %p63 = scmp.ne.s32.totalorder %s49, %s50
      %p64 = scmp.eq.s32.totalorder %s28, 1
      %p65 = por %p63, %p64
      %p67 = scmp.ne.s32.totalorder %s50, %s66
      %p68 = scmp.eq.s32.totalorder %s28, 0
      %p69 = por %p67, %p68
      %s70 = ssub.s32 %s29, %s41
      %p71 = scmp.eq.s32.totalorder %s70, 0
      %s73 = sadd.s32 %s72, 1
      %s74 = scalar_select %p71, %s72, %s73
      %p77 = pneg %p71
      %p78 = scmp.eq.s32.totalorder %s22, 1
      %p79 = por %p77, %p78
      %p80 = scmp.ne.s32.totalorder %s72, %s75
      %p81 = scmp.eq.s32.totalorder %s22, 0
      %p82 = por %p80, %p81
      %p83 = scmp.ne.s32.totalorder %s72, %s75
      %p84 = scmp.eq.s32.totalorder %s27, 1
      %p85 = por %p83, %p84
      %p86 = scmp.ne.s32.totalorder %s75, %s76
      %p87 = scmp.eq.s32.totalorder %s27, 0
      %p88 = por %p86, %p87
      %p89 = scmp.ne.s32.totalorder %s75, %s76
      %p90 = scmp.eq.s32.totalorder %s28, 1
      %p91 = por %p89, %p90
      %p93 = scmp.ne.s32.totalorder %s76, %s92
      %p94 = scmp.eq.s32.totalorder %s28, 0
      %p95 = por %p93, %p94
      %s96 = ssub.s32 %s29, %s41
      %s97 = ssub.s32 %s30, %s37
      %s98 = sor.u32 %s96, %s97
      %p99 = scmp.eq.s32.totalorder %s98, 0
      %s101 = sadd.s32 %s100, 1
      %s102 = scalar_select %p99, %s100, %s101
      %p105 = pneg %p99
      %p106 = scmp.eq.s32.totalorder %s22, 1
      %p107 = por %p105, %p106
      %p108 = scmp.ne.s32.totalorder %s100, %s103
      %p109 = scmp.eq.s32.totalorder %s22, 0
      %p110 = por %p108, %p109
      %p111 = scmp.ne.s32.totalorder %s100, %s103
      %p112 = scmp.eq.s32.totalorder %s27, 1
      %p113 = por %p111, %p112
      %p114 = scmp.ne.s32.totalorder %s103, %s104
      %p115 = scmp.eq.s32.totalorder %s27, 0
      %p116 = por %p114, %p115
      %p117 = scmp.ne.s32.totalorder %s103, %s104
      %p118 = scmp.eq.s32.totalorder %s28, 1
      %p119 = por %p117, %p118
      %p121 = scmp.ne.s32.totalorder %s104, %s120
      %p122 = scmp.eq.s32.totalorder %s28, 0
      %p123 = por %p121, %p122
      %s124 = ssub.s32 %s29, %s41
      %s125 = ssub.s32 %s30, %s37
      %s126 = sor.u32 %s124, %s125
      %p127 = scmp.eq.s32.totalorder %s126, 0
      %s129 = sadd.s32 %s128, 1
      %s130 = scalar_select %p127, %s128, %s129
      %p133 = pneg %p127
      %p134 = scmp.eq.s32.totalorder %s22, 1
      %p135 = por %p133, %p134
      %p136 = scmp.ne.s32.totalorder %s128, %s131
      %p137 = scmp.eq.s32.totalorder %s22, 0
      %p138 = por %p136, %p137
      %p139 = scmp.ne.s32.totalorder %s128, %s131
      %p140 = scmp.eq.s32.totalorder %s27, 1
      %p141 = por %p139, %p140
      %p142 = scmp.ne.s32.totalorder %s131, %s132
      %p143 = scmp.eq.s32.totalorder %s27, 0
      %p144 = por %p142, %p143
      %p145 = scmp.ne.s32.totalorder %s131, %s132
      %p146 = scmp.eq.s32.totalorder %s28, 1
      %p147 = por %p145, %p146
      %p149 = scmp.ne.s32.totalorder %s132, %s148
      %p150 = scmp.eq.s32.totalorder %s28, 0
      %p151 = por %p149, %p150
      %p152 = scmp.le.s32.totalorder 1, %s22
      %p153 = scmp.lt.s32.totalorder %s22, 3
      %p154 = pnand %p152, %p153
      %p155 = pneg %p154
      // Predicated region
      $region9: #{tpu_custom_call.1} parent=5 // pred_check
        _
      $region10: #{tpu_custom_call.1} parent=5 // pred_check_branch
        %157 = sbr.rel (%p154) target = $region12
      $region11: #{tpu_custom_call.1} parent=5 // pred_region
        %s158 = ssub.s32 %s22, 1
      $region12: #{tpu_custom_call.1} parent=5 // pred_fallthru
        _
      %p159 = scmp.lt.s32.totalorder %s22, 2
      // Predicated region
      $region13: #{tpu_custom_call.1} parent=5 // pred_check
        %p160 = pneg %p159
      $region14: #{tpu_custom_call.1} parent=5 // pred_check_branch
        %162 = sbr.rel (%p160) target = $region16
      $region15: #{tpu_custom_call.1} parent=5 // pred_region
        // Predicated region
        $region17: #{tpu_custom_call.1} parent=15 // pred_check
          %p163 = pneg %p56
        $region18: #{tpu_custom_call.1} parent=15 // pred_check_branch
          %165 = sbr.rel (%p163) target = $region20
        $region19: #{tpu_custom_call.1} parent=15 // pred_region
          %s166 = sand.u32 %s46, 1
          %s167 = scalar_lea.sflag [#allocation3], %s166
          %s168 = sand.u32 %s46, 1
          %s169 = smul.addr %s168, 8
          %s170 = scalar_lea.vmem [#allocation2], %s169
          %172 = vsyncadd %s167, 0
          %s173 = sadd.s32 %s30, %s29
          %s174 = smul.addr %s173, 8
          %s175 = scalar_lea.hbm %s0, %s174
          %s177 = sshll.u32 %s175, 4
          %s178 = int_to_ptr.hbm [resolvable:$true] %s177
          %s179 = sshll.u32 %s170, 4
          %s180 = int_to_ptr.vmem [resolvable:$true] %s179
          %182 = dma.hbm_to_vmem [thread:$0]  %s178, 128, %s180, %s167
        $region20: #{tpu_custom_call.1} parent=15 // pred_fallthru
          _
        // Predicated region
        $region21: #{tpu_custom_call.1} parent=15 // pred_check
          %p183 = pneg %p82
        $region22: #{tpu_custom_call.1} parent=15 // pred_check_branch
          %185 = sbr.rel (%p183) target = $region24
        $region23: #{tpu_custom_call.1} parent=15 // pred_region
          %s186 = sand.u32 %s72, 1
          %s187 = scalar_lea.sflag [#allocation6], %s186
          %s188 = sand.u32 %s72, 1
          %s189 = smul.addr %s188, 8
          %s190 = scalar_lea.vmem [#allocation5], %s189
          %192 = vsyncadd %s187, 0
          %s193 = smul.addr %s29, 8
          %s194 = scalar_lea.hbm %s1, %s193
          %s196 = sshll.u32 %s194, 4
          %s197 = int_to_ptr.hbm [resolvable:$true] %s196
          %s198 = sshll.u32 %s190, 4
          %s199 = int_to_ptr.vmem [resolvable:$true] %s198
          %201 = dma.hbm_to_vmem [thread:$0]  %s197, 128, %s199, %s187
        $region24: #{tpu_custom_call.1} parent=15 // pred_fallthru
          _
      $region16: #{tpu_custom_call.1} parent=5 // pred_fallthru
        _
      %p202 = scmp.le.s32.totalorder 1, %s22
      %p203 = scmp.lt.s32.totalorder %s22, 3
      %p204 = pnand %p202, %p203
      %p205 = pneg %p204
      // Predicated region
      $region25: #{tpu_custom_call.1} parent=5 // pred_check
        _
      $region26: #{tpu_custom_call.1} parent=5 // pred_check_branch
        %207 = sbr.rel (%p204) target = $region28
      $region27: #{tpu_custom_call.1} parent=5 // pred_region
        %s208 = ssub.s32 %s22, 1
        %s209 = sand.u32 %s49, 1
        %s210 = scalar_lea.sflag [#allocation3], %s209
        %s211 = sand.u32 %s49, 1
        %s212 = smul.addr %s211, 8
        %s213 = scalar_lea.vmem [#allocation2], %s212
        // Predicated region
        $region29: #{tpu_custom_call.1} parent=27 // pred_check
          %p214 = pneg %p62
        $region30: #{tpu_custom_call.1} parent=27 // pred_check_branch
          %216 = sbr.rel (%p214) target = $region32
        $region31: #{tpu_custom_call.1} parent=27 // pred_region
          %218 = dma.done %s210, 128
        $region32: #{tpu_custom_call.1} parent=27 // pred_fallthru
          _
        %s219 = sand.u32 %s75, 1
        %s220 = scalar_lea.sflag [#allocation6], %s219
        %s221 = sand.u32 %s75, 1
        %s222 = smul.addr %s221, 8
        %s223 = scalar_lea.vmem [#allocation5], %s222
        // Predicated region
        $region33: #{tpu_custom_call.1} parent=27 // pred_check
          %p224 = pneg %p88
        $region34: #{tpu_custom_call.1} parent=27 // pred_check_branch
          %226 = sbr.rel (%p224) target = $region36
        $region35: #{tpu_custom_call.1} parent=27 // pred_region
          %228 = dma.done %s220, 128
        $region36: #{tpu_custom_call.1} parent=27 // pred_fallthru
          _
        %s229 = sand.u32 %s49, 1
        %s230 = scalar_lea.sflag [#allocation3], %s229
        %s231 = sand.u32 %s49, 1
        %s232 = smul.addr %s231, 8
        %s233 = scalar_lea.vmem [#allocation2], %s232
        %p234 = pneg %p62
        %p235 = pneg %p59
        %s236 = sand.u32 %s75, 1
        %s237 = scalar_lea.sflag [#allocation6], %s236
        %s238 = sand.u32 %s75, 1
        %s239 = smul.addr %s238, 8
        %s240 = scalar_lea.vmem [#allocation5], %s239
        %p241 = pneg %p88
        %p242 = pneg %p85
        %p243 = pneg %p116
        %p244 = pneg %p113
        %s245 = sand.u32 %s103, 1
        %s246 = scalar_lea.sflag [#allocation4], %s245
        %s247 = sand.u32 %s103, 1
        %s248 = smul.addr %s247, 8
        %s249 = scalar_lea.vmem [#allocation7], %s248
        %p250 = pneg %p144
        %p251 = pneg %p141
        %s252 = sand.u32 %s131, 1
        %s253 = scalar_lea.sflag [#allocation9], %s252
        %s254 = sand.u32 %s131, 1
        %s255 = smul.addr %s254, 8
        %s256 = scalar_lea.vmem [#allocation8], %s255
        %v257 = vld [vmem:[%s213] sm:$0xff]
        %v258 = vld [vmem:[%s223] sm:$0xff]
        %v259 = vmul.f32 %v257, 0.17677669
        %vm260 = vcmask 261120
        %v262 = vsel %vm260, %v259, 0
        %v265 = vsel %vm260, %v258, 0
        %267 = vmatpush.xpose.msra.mxu0 0.0
        %268 = vmatpush.xpose.msra.mxu0 0.0
        %269 = vmatpush.xpose.msra.mxu0 0.0
        %270 = vmatpush.xpose.msra.mxu0 0.0
        %271 = vmatpush.xpose.msra.mxu0 0.0
        %272 = vmatpush.xpose.msra.mxu0 0.0
        %273 = vmatpush.xpose.msra.mxu0 0.0
        %274 = vmatpush.xpose.msra.mxu0 0.0
        %275 = vmatpush.xpose.msra.mxu0 0.0
        %276 = vmatpush.xpose.msra.mxu0 0.0
        %277 = vmatpush.xpose.msra.mxu0 0.0
        %278 = vmatpush.xpose.msra.mxu0 0.0
        %279 = vmatpush.xpose.msra.mxu0 0.0
        %280 = vmatpush.xpose.msra.mxu0 0.0
        %281 = vmatpush.xpose.msra.mxu0 0.0
        %282 = vmatpush.xpose.msra.mxu0 %v265
        %283 = vmatmul.f32.gmra.mxu0 %v262
        %v284 = vpop.f32.mrf.mxu0
        %v285 = vadd.f32 0.0, %v284
        %286 = vdwg.mxu0
        %vm287 = vcmask 64512
        %v288 = vsel %vm287, %v285, -inf
        %289 = vmax.xlane.f32.xlu0 %v288
        %v290 = vpop.xlane.xlu0 %289
        %v291 = vsub.f32 %v285, %v290
        %v292 = vmul.f32 %v291, 1.442695
        %v293 = vpow.pop %v292
        %v294 = vsel %vm287, %v293, 0.0
        %295 = vadd.xlane.f32.xlu0 %v294
        %v296 = vpop.xlane.xlu0 %295
        %v297 = vrcp.pop %v296
        %v298 = vmul.f32 %v296, %v297
        %v299 = vsub.f32 2.0, %v298
        %v300 = vmul.f32 %v297, %v299
        %v301 = vmul.f32 %v293, %v300
        %302 = vst.msk [vmem:[%s256] sm:$0xff] %vm287, %v301
        %v303 = vld [vmem:[%s256] sm:$0xff]
        %v305 = vsel %vm287, %v303, 0
        %307 = vmatpush.msra.mxu0 0.0
        %308 = vmatpush.msra.mxu0 0.0
        %309 = vmatpush.msra.mxu0 0.0
        %310 = vmatpush.msra.mxu0 0.0
        %311 = vmatpush.msra.mxu0 0.0
        %312 = vmatpush.msra.mxu0 0.0
        %313 = vmatpush.msra.mxu0 0.0
        %314 = vmatpush.msra.mxu0 0.0
        %315 = vmatpush.msra.mxu0 0.0
        %316 = vmatpush.msra.mxu0 0.0
        %317 = vmatpush.msra.mxu0 0.0
        %318 = vmatpush.msra.mxu0 0.0
        %319 = vmatpush.msra.mxu0 0.0
        %320 = vmatpush.msra.mxu0 0.0
        %321 = vmatpush.msra.mxu0 0.0
        %322 = vmatpush.msra.mxu0 %v258
        %323 = vmatmul.f32.gmra.mxu0 %v305
        %v324 = vpop.f32.mrf.mxu0
        %v325 = vadd.f32 %v257, %v324
        %326 = vdwg.mxu0
        %327 = vst.msk [vmem:[%s249] sm:$0xff] %vm260, %v325
        %s328 = sand.u32 %s103, 1
        %s329 = scalar_lea.sflag [#allocation4], %s328
        %s330 = sand.u32 %s103, 1
        %s331 = smul.addr %s330, 8
        %s332 = scalar_lea.vmem [#allocation7], %s331
        %s333 = sand.u32 %s131, 1
        %s334 = scalar_lea.sflag [#allocation9], %s333
        %s335 = sand.u32 %s131, 1
        %s336 = smul.addr %s335, 8
        %s337 = scalar_lea.vmem [#allocation8], %s336
        // Predicated region
        $region37: #{tpu_custom_call.1} parent=27 // pred_check
          %p338 = pneg %p113
        $region38: #{tpu_custom_call.1} parent=27 // pred_check_branch
          %340 = sbr.rel (%p338) target = $region40
        $region39: #{tpu_custom_call.1} parent=27 // pred_region
          %342 = vsyncadd %s329, 0
          %s343 = sadd.s32 %s32, %s31
          %s344 = smul.addr %s343, 8
          %s345 = scalar_lea.hbm %s2, %s344
          %s347 = sshll.u32 %s332, 4
          %s348 = int_to_ptr.vmem [resolvable:$true] %s347
          %s349 = sshll.u32 %s345, 4
          %s350 = int_to_ptr.hbm [resolvable:$true] %s349
          %352 = dma.vmem_to_hbm [thread:$0]  %s348, 128, %s350, %s329
        $region40: #{tpu_custom_call.1} parent=27 // pred_fallthru
          _
        // Predicated region
        $region41: #{tpu_custom_call.1} parent=27 // pred_check
          %p353 = pneg %p141
        $region42: #{tpu_custom_call.1} parent=27 // pred_check_branch
          %355 = sbr.rel (%p353) target = $region44
        $region43: #{tpu_custom_call.1} parent=27 // pred_region
          %357 = vsyncadd %s334, 0
          %s358 = sadd.s32 %s32, %s31
          %s359 = smul.addr %s358, 8
          %s360 = scalar_lea.hbm %s3, %s359
          %s362 = sshll.u32 %s337, 4
          %s363 = int_to_ptr.vmem [resolvable:$true] %s362
          %s364 = sshll.u32 %s360, 4
          %s365 = int_to_ptr.hbm [resolvable:$true] %s364
          %367 = dma.vmem_to_hbm [thread:$0]  %s363, 128, %s365, %s334
        $region44: #{tpu_custom_call.1} parent=27 // pred_fallthru
          _
      $region28: #{tpu_custom_call.1} parent=5 // pred_fallthru
        _
      %p368 = scmp.le.s32.totalorder 2, %s22
      // Predicated region
      $region45: #{tpu_custom_call.1} parent=5 // pred_check
        %p369 = pneg %p368
      $region46: #{tpu_custom_call.1} parent=5 // pred_check_branch
        %371 = sbr.rel (%p369) target = $region48
      $region47: #{tpu_custom_call.1} parent=5 // pred_region
        %s372 = ssub.s32 %s22, 2
        // Predicated region
        $region49: #{tpu_custom_call.1} parent=47 // pred_check
          %p373 = pneg %p119
        $region50: #{tpu_custom_call.1} parent=47 // pred_check_branch
          %375 = sbr.rel (%p373) target = $region52
        $region51: #{tpu_custom_call.1} parent=47 // pred_region
          %s376 = sand.u32 %s104, 1
          %s377 = scalar_lea.sflag [#allocation4], %s376
          %s378 = sand.u32 %s104, 1
          %s379 = smul.addr %s378, 8
          %s380 = scalar_lea.vmem [#allocation7], %s379
          %382 = dma.done %s377, 128
        $region52: #{tpu_custom_call.1} parent=47 // pred_fallthru
          _
        // Predicated region
        $region53: #{tpu_custom_call.1} parent=47 // pred_check
          %p383 = pneg %p147
        $region54: #{tpu_custom_call.1} parent=47 // pred_check_branch
          %385 = sbr.rel (%p383) target = $region56
        $region55: #{tpu_custom_call.1} parent=47 // pred_region
          %s386 = sand.u32 %s132, 1
          %s387 = scalar_lea.sflag [#allocation9], %s386
          %s388 = sand.u32 %s132, 1
          %s389 = smul.addr %s388, 8
          %s390 = scalar_lea.vmem [#allocation8], %s389
          %392 = dma.done %s387, 128
        $region56: #{tpu_custom_call.1} parent=47 // pred_fallthru
          _
      $region48: #{tpu_custom_call.1} parent=5 // pred_fallthru
        _
    $region6: #{tpu_custom_call.1} parent=1 // loop_footer
      %s26 = sadd.s32 1, %s22
    $region7: #{tpu_custom_call.1} parent=1 // loop_footer_branch
      %21 = sbr.rel target = $region3
    $region8: #{tpu_custom_call.1} parent=1 // loop_exit
      _
    %393 = vsyncpa [#allocation3], 1
    %s394 = scalar_lea.sflag [#allocation3], 1
    %395 = vsyncpa %s394, 1
    %396 = vsyncpa [#allocation6], 1
    %s397 = scalar_lea.sflag [#allocation6], 1
    %398 = vsyncpa %s397, 1
    %399 = vsyncpa [#allocation4], 1
    %s400 = scalar_lea.sflag [#allocation4], 1
    %401 = vsyncpa %s400, 1
    %402 = vsyncpa [#allocation9], 1
    %s403 = scalar_lea.sflag [#allocation9], 1
    %404 = vsyncpa %s403, 1

</llo_original>
